<compile_context>
chip_gen: v5e
topology: v5e:2x2
jax: 0.10.0
libtpu: 0.0.40
codegen_flags: <defaults>
</compile_context>

<pallas_src>
import jax
import jax.numpy as jnp
from jax.experimental import pallas as pl
from jax.experimental.pallas import tpu as pltpu

NUM_INPUTS = 4     # env.observation_space.shape[0] for CartPole-v0
NUM_ACTIONS = 2    # env.action_space.n for CartPole-v0
HIDDEN = 32
LANE = 128         # TPU lane width; also the padded output width

# Row offsets inside the packed parameter slab (all multiples of 8 -> sublane aligned).
W1_ROW = 0                      # rows [0, 4)   : (4, 32)   layer-1 weights
B1_ROW = 8                      # row 8         : (32,)     layer-1 bias
W2_ROW = 16                     # rows [16, 48) : (32, 32)  layer-2 weights
B2_ROW = 48                     # row 48        : (32,)     layer-2 bias
W3_ROW = 56                     # rows [56, 88) : (32, 128) layer-3 weights (cols>=2 zero)
B3_ROW = 88                     # row 88        : (128,)    layer-3 bias   (cols>=2 zero)
SLAB_ROWS = 96                  # total rows (multiple of 8); 96*128*4 B = 48 KiB


def dqn_kernel(x_ref, p_ref, o_ref):
    x = x_ref[...]                                              # (TB, 4) f32

    # ---- Layer 1: Linear(4 -> 32) + ReLU, on the VPU (K=4 too small for MXU) ----
    h1 = p_ref[B1_ROW:B1_ROW + 1, :HIDDEN]                      # bias (1, 32)
    for k in range(NUM_INPUTS):                                 # 4 broadcast FMAs
        h1 = h1 + x[:, k:k + 1] * p_ref[W1_ROW + k:W1_ROW + k + 1, :HIDDEN]
    h1 = jnp.maximum(h1, 0.0)                                   # (TB, 32)

    # ---- Layer 2: Linear(32 -> 32) + ReLU, on the MXU ----
    w2 = p_ref[W2_ROW:W2_ROW + HIDDEN, :HIDDEN]                 # (32, 32)
    b2 = p_ref[B2_ROW:B2_ROW + 1, :HIDDEN]                      # (1, 32)
    h2 = jnp.maximum(
        jnp.dot(h1, w2, preferred_element_type=jnp.float32) + b2, 0.0)

    # ---- Layer 3: Linear(32 -> 2), lane-dense padded output (cols >= 2 are zero) ----
    w3 = p_ref[W3_ROW:W3_ROW + HIDDEN, :]                       # (32, 128)
    b3 = p_ref[B3_ROW:B3_ROW + 1, :]                            # (1, 128)
    q = jnp.dot(h2, w3, preferred_element_type=jnp.float32) + b3
    o_ref[...] = q.astype(o_ref.dtype)                          # (TB, 128) full-lane store


def pack_params(params):
    """Pack (w1,b1,w2,b2,w3,b3) into a single (96, 128) f32 slab."""
    w1, b1, w2, b2, w3, b3 = params
    slab = jnp.zeros((SLAB_ROWS, LANE), jnp.float32)
    slab = slab.at[W1_ROW:W1_ROW + NUM_INPUTS, :HIDDEN].set(w1)
    slab = slab.at[B1_ROW, :HIDDEN].set(b1.reshape(-1))
    slab = slab.at[W2_ROW:W2_ROW + HIDDEN, :HIDDEN].set(w2)
    slab = slab.at[B2_ROW, :HIDDEN].set(b2.reshape(-1))
    slab = slab.at[W3_ROW:W3_ROW + HIDDEN, :NUM_ACTIONS].set(w3)
    slab = slab.at[B3_ROW, :NUM_ACTIONS].set(b3.reshape(-1))
    return slab


def dqn_forward(x, slab, *, block_b=256):
    """Batched forward: x (B, 4) f32, slab from pack_params -> (B, 2) Q-values."""
    B = x.shape[0]
    # Batch tile: multiple of 8, at most block_b.
    tb = min(block_b, max(8, pl.cdiv(B, 8) * 8))
    b_pad = pl.cdiv(B, tb) * tb
    if b_pad != B:
        x = jnp.pad(x, ((0, b_pad - B), (0, 0)))

    out = pl.pallas_call(
        dqn_kernel,
        out_shape=jax.ShapeDtypeStruct((b_pad, LANE), jnp.float32),
        grid=(b_pad // tb,),
        in_specs=[
            pl.BlockSpec((tb, NUM_INPUTS), lambda i: (i, 0)),
            # Same block index every step -> weight slab DMA'd once, stays resident.
            pl.BlockSpec((SLAB_ROWS, LANE), lambda i: (0, 0)),
        ],
        out_specs=pl.BlockSpec((tb, LANE), lambda i: (i, 0)),
        compiler_params=pltpu.CompilerParams(
            dimension_semantics=("parallel",)),
    )(x, slab)
    return out[:B, :NUM_ACTIONS]


def init_params(key):
    """Deterministic init mimicking PyTorch Linear default (U[-1/sqrt(fan_in), +])."""
    def linear(key, fan_in, fan_out):
        kw, kb = jax.random.split(key)
        bound = 1.0 / (fan_in ** 0.5)
        # stored as (in, out) so kernel does x @ W; equals PyTorch x @ W_pt.T
        w = jax.random.uniform(kw, (fan_in, fan_out), jnp.float32, -bound, bound)
        b = jax.random.uniform(kb, (1, fan_out), jnp.float32, -bound, bound)
        return w, b

    k1, k2, k3 = jax.random.split(key, 3)
    w1, b1 = linear(k1, NUM_INPUTS, HIDDEN)
    w2, b2 = linear(k2, HIDDEN, HIDDEN)
    w3, b3 = linear(k3, HIDDEN, NUM_ACTIONS)
    return (w1, b1, w2, b2, w3, b3)


def reference_forward(x, params):
    w1, b1, w2, b2, w3, b3 = params
    h1 = jnp.maximum(x @ w1 + b1, 0.0)
    h2 = jnp.maximum(h1 @ w2 + b2, 0.0)
    return h2 @ w3 + b3


if __name__ == "__main__":
    key = jax.random.PRNGKey(0)
    kx, kx2, kp = jax.random.split(key, 3)

    params = init_params(kp)
    slab = pack_params(params)

    # Small batch of CartPole states (single tile, grid=(1,)).
    B = 8
    x = jax.random.normal(kx, (B, NUM_INPUTS), jnp.float32)
    q = jax.block_until_ready(dqn_forward(x, slab))
    q_ref = reference_forward(x, params)
    assert q.shape == (B, NUM_ACTIONS)
    assert jnp.allclose(q, q_ref, atol=1e-5, rtol=1e-5), "mismatch vs reference (B=8)"

    # Ragged batch exercising the batch grid + padding path (replay-buffer style).
    B2 = 200
    x2 = jax.random.normal(kx2, (B2, NUM_INPUTS), jnp.float32)
    q2 = jax.block_until_ready(dqn_forward(x2, slab, block_b=64))
    q2_ref = reference_forward(x2, params)
    assert q2.shape == (B2, NUM_ACTIONS)
    assert jnp.allclose(q2, q2_ref, atol=1e-5, rtol=1e-5), "mismatch vs reference (B=200)"

    print("KERNEL_OK")
</pallas_src>

<mosaic_0001>
module attributes {stable_mosaic.version = 11 : i64} {
  func.func @dqn_kernel(%arg0: i32, %arg1: memref<8x4xf32, #tpu.memory_space<vmem>>, %arg2: memref<96x128xf32, #tpu.memory_space<vmem>>, %arg3: memref<8x128xf32, #tpu.memory_space<vmem>>) attributes {dimension_semantics = [#tpu.dimension_semantics<parallel>], iteration_bounds = array<i64: 1>, scalar_prefetch = 0 : i64, scratch_operands = 0 : i64, tpu.core_type = #tpu.core_type<tc>, window_params = [{transform_indices = @transform_0, window_bounds = array<i64: 8, 4>}, {pipeline_mode = #tpu.pipeline_mode<synchronous>, transform_indices = @transform_1, window_bounds = array<i64: 96, 128>}, {transform_indices = @transform_2, window_bounds = array<i64: 8, 128>}]} {
    %c0 = arith.constant 0 : index
    %c0_0 = arith.constant 0 : index
    %0 = vector.load %arg1[%c0, %c0_0] : memref<8x4xf32, #tpu.memory_space<vmem>>, vector<8x4xf32>
    %c8 = arith.constant 8 : index
    %c0_1 = arith.constant 0 : index
    %1 = vector.load %arg2[%c8, %c0_1] : memref<96x128xf32, #tpu.memory_space<vmem>>, vector<1x32xf32>
    %2 = vector.extract_strided_slice %0 {offsets = [0, 0], sizes = [8, 1], strides = [1, 1]} : vector<8x4xf32> to vector<8x1xf32>
    %c0_2 = arith.constant 0 : index
    %c0_3 = arith.constant 0 : index
    %3 = vector.load %arg2[%c0_2, %c0_3] : memref<96x128xf32, #tpu.memory_space<vmem>>, vector<1x32xf32>
    %4 = vector.broadcast %2 : vector<8x1xf32> to vector<8x32xf32>
    %5 = vector.broadcast %3 : vector<1x32xf32> to vector<8x32xf32>
    %6 = arith.mulf %4, %5 : vector<8x32xf32>
    %7 = vector.broadcast %1 : vector<1x32xf32> to vector<8x32xf32>
    %8 = arith.addf %7, %6 : vector<8x32xf32>
    %9 = vector.extract_strided_slice %0 {offsets = [0, 1], sizes = [8, 1], strides = [1, 1]} : vector<8x4xf32> to vector<8x1xf32>
    %c1 = arith.constant 1 : index
    %c0_4 = arith.constant 0 : index
    %10 = vector.load %arg2[%c1, %c0_4] : memref<96x128xf32, #tpu.memory_space<vmem>>, vector<1x32xf32>
    %11 = vector.broadcast %9 : vector<8x1xf32> to vector<8x32xf32>
    %12 = vector.broadcast %10 : vector<1x32xf32> to vector<8x32xf32>
    %13 = arith.mulf %11, %12 : vector<8x32xf32>
    %14 = arith.addf %8, %13 : vector<8x32xf32>
    %15 = vector.extract_strided_slice %0 {offsets = [0, 2], sizes = [8, 1], strides = [1, 1]} : vector<8x4xf32> to vector<8x1xf32>
    %c2 = arith.constant 2 : index
    %c0_5 = arith.constant 0 : index
    %16 = vector.load %arg2[%c2, %c0_5] : memref<96x128xf32, #tpu.memory_space<vmem>>, vector<1x32xf32>
    %17 = vector.broadcast %15 : vector<8x1xf32> to vector<8x32xf32>
    %18 = vector.broadcast %16 : vector<1x32xf32> to vector<8x32xf32>
    %19 = arith.mulf %17, %18 : vector<8x32xf32>
    %20 = arith.addf %14, %19 : vector<8x32xf32>
    %21 = vector.extract_strided_slice %0 {offsets = [0, 3], sizes = [8, 1], strides = [1, 1]} : vector<8x4xf32> to vector<8x1xf32>
    %c3 = arith.constant 3 : index
    %c0_6 = arith.constant 0 : index
    %22 = vector.load %arg2[%c3, %c0_6] : memref<96x128xf32, #tpu.memory_space<vmem>>, vector<1x32xf32>
    %23 = vector.broadcast %21 : vector<8x1xf32> to vector<8x32xf32>
    %24 = vector.broadcast %22 : vector<1x32xf32> to vector<8x32xf32>
    %25 = arith.mulf %23, %24 : vector<8x32xf32>
    %26 = arith.addf %20, %25 : vector<8x32xf32>
    %cst = arith.constant 0.000000e+00 : f32
    %27 = vector.broadcast %cst : f32 to vector<8x32xf32>
    %28 = arith.maximumf %26, %27 : vector<8x32xf32>
    %c16 = arith.constant 16 : index
    %c0_7 = arith.constant 0 : index
    %29 = vector.load %arg2[%c16, %c0_7] : memref<96x128xf32, #tpu.memory_space<vmem>>, vector<32x32xf32>
    %c48 = arith.constant 48 : index
    %c0_8 = arith.constant 0 : index
    %30 = vector.load %arg2[%c48, %c0_8] : memref<96x128xf32, #tpu.memory_space<vmem>>, vector<1x32xf32>
    %cst_9 = arith.constant dense<0.000000e+00> : vector<8x32xf32>
    %31 = tpu.matmul %28, %29, %cst_9 {dimension_numbers = #tpu.dot_dimension_numbers<[1], [0], [0], [1], [0, 0, 1, 1], [], []>} : vector<8x32xf32>, vector<32x32xf32>, vector<8x32xf32> -> vector<8x32xf32>
    %32 = vector.broadcast %30 : vector<1x32xf32> to vector<8x32xf32>
    %33 = arith.addf %31, %32 : vector<8x32xf32>
    %cst_10 = arith.constant 0.000000e+00 : f32
    %34 = vector.broadcast %cst_10 : f32 to vector<8x32xf32>
    %35 = arith.maximumf %33, %34 : vector<8x32xf32>
    %c56 = arith.constant 56 : index
    %c0_11 = arith.constant 0 : index
    %36 = vector.load %arg2[%c56, %c0_11] : memref<96x128xf32, #tpu.memory_space<vmem>>, vector<32x128xf32>
    %c88 = arith.constant 88 : index
    %c0_12 = arith.constant 0 : index
    %37 = vector.load %arg2[%c88, %c0_12] : memref<96x128xf32, #tpu.memory_space<vmem>>, vector<1x128xf32>
    %cst_13 = arith.constant dense<0.000000e+00> : vector<8x128xf32>
    %38 = tpu.matmul %35, %36, %cst_13 {dimension_numbers = #tpu.dot_dimension_numbers<[1], [0], [0], [1], [0, 0, 1, 1], [], []>} : vector<8x32xf32>, vector<32x128xf32>, vector<8x128xf32> -> vector<8x128xf32>
    %39 = vector.broadcast %37 : vector<1x128xf32> to vector<8x128xf32>
    %40 = arith.addf %38, %39 : vector<8x128xf32>
    %c0_14 = arith.constant 0 : index
    %c0_15 = arith.constant 0 : index
    %41 = vector.load %arg3[%c0_14, %c0_15] : memref<8x128xf32, #tpu.memory_space<vmem>>, vector<8x128xf32>
    tpu.vector_store %arg3[%c0_14, %c0_15], %40 {strides = array<i32>} : memref<8x128xf32, #tpu.memory_space<vmem>>, vector<8x128xf32>,
    return
  }
  func.func @transform_0(%arg0: i32) -> (i32, i32) {
    %c0_i32 = arith.constant 0 : i32
    %c0_i32_0 = arith.constant 0 : i32
    return %arg0, %c0_i32 : i32, i32
  }
  func.func @transform_1(%arg0: i32) -> (i32, i32) {
    %c0_i32 = arith.constant 0 : i32
    %c0_i32_0 = arith.constant 0 : i32
    %c0_i32_1 = arith.constant 0 : i32
    return %c0_i32, %c0_i32_0 : i32, i32
  }
  func.func @transform_2(%arg0: i32) -> (i32, i32) {
    %c0_i32 = arith.constant 0 : i32
    %c0_i32_0 = arith.constant 0 : i32
    return %arg0, %c0_i32 : i32, i32
  }
}

</mosaic_0001>

<llo_original>
// kernel: tpu_custom_call.1
$region0: #{tpu_custom_call.1}
  #allocation0 [shape = 'u32[]', space=smem, size = 0x4, offset = 0x4, fixed_abs, tag = 'smem constant byte address 0x4 - core index']
  #allocation1 [shape = 'u32[72,128]{1,0:T(1,128)}', space=vmem, size = 0x9000, scoped, tag = 'internal scratch']
  %s0 = inlined_call_operand.vmem [shape: f32[8,4], index: 0, kind: input, shape index: {}]
  %s1 = inlined_call_operand.hbm [shape: f32[96,128], index: 1, kind: input, shape index: {}]
  %s2 = inlined_call_operand.hbm [shape: f32[8,128], index: 2, kind: output, shape index: {}]
  %s3 = sld [smem:[#allocation0]]
  $region22: #{tpu_custom_call.1} parent=0
    _
  %s5 = ssub.s32 1, %s3
  %s6 = scalar_select 0, %s5, %s3
  $region1: #{tpu_custom_call.1} parent=0
    #allocation2 [shape = 'u8[49152]{0}', space=vmem, size = 0xc000, scoped, tag = 'input window, operand 1, single buffered']
    #allocation3 [shape = 's32[1]{0}', space=sflag, size = 0x4, scoped, tag = 'scoped memory for tpu_custom_call.1']
    #allocation4 [shape = 's32[1]{0}', space=sflag, size = 0x4, scoped, tag = 'scoped memory for tpu_custom_call.1']
    #allocation5 [shape = 'u8[4096]{0}', space=vmem, size = 0x1000, scoped, tag = 'output window, operand 0, single buffered']
    %7 = vsyncpa [#allocation3], 0
    %8 = vsyncpa [#allocation4], 0
    // Predicated region
    $region2: #{tpu_custom_call.1} parent=1 // pred_check
      _
    $region3: #{tpu_custom_call.1} parent=1 // pred_check_branch
      %10 = sbr.rel (0) target = $region5
    $region4: #{tpu_custom_call.1} parent=1 // pred_region
      _
    $region5: #{tpu_custom_call.1} parent=1 // pred_fallthru
      _
    // Predicated region
    $region6: #{tpu_custom_call.1} parent=1 // pred_check
      _
    $region7: #{tpu_custom_call.1} parent=1 // pred_check_branch
      %12 = sbr.rel (0) target = $region9
    $region8: #{tpu_custom_call.1} parent=1 // pred_region
      %14 = vsyncadd [#allocation3], 0
      %s15 = sshll.u32 %s1, 4
      %s16 = int_to_ptr.hbm [resolvable:$true] %s15
      %s17 = sshll.u32 [#allocation2], 4
      %s18 = int_to_ptr.vmem [resolvable:$true] %s17
      %23 = dma.hbm_to_vmem [thread:$0]  %s16, 1536, %s18, [#allocation3], 128, 128, 8
    $region9: #{tpu_custom_call.1} parent=1 // pred_fallthru
      _
    // Predicated region
    $region10: #{tpu_custom_call.1} parent=1 // pred_check
      _
    $region11: #{tpu_custom_call.1} parent=1 // pred_check_branch
      %25 = sbr.rel (0) target = $region13
    $region12: #{tpu_custom_call.1} parent=1 // pred_region
      %27 = dma.done [#allocation3], 1536
    $region13: #{tpu_custom_call.1} parent=1 // pred_fallthru
      _
    %v28 = vld [vmem:[%s0] sm:$0xff]
    %v29 = vld [vmem:[#allocation2 + $0x8] sm:$0x1]
    %v30 = vld [vmem:[#allocation2] sm:$0x1]
    %32 = vset.pattern.permute.xlu0 0
    %33 = vperm.xlu0 %32, %v28
    %v34 = vpop.permute.xlu0 %33
    %v36 = vperm.slane %v30, 0
    %v37 = vmul.f32 %v34, %v36
    %v38 = vperm.slane %v29, 0
    %v39 = vadd.f32 %v38, %v37
    %v40 = vld [vmem:[#allocation2 + $0x1] sm:$0x1]
    %41 = vset.pattern.permute.xlu0 1
    %42 = vperm.xlu0 %41, %v28
    %v43 = vpop.permute.xlu0 %42
    %v45 = vperm.slane %v40, 0
    %v46 = vmul.f32 %v43, %v45
    %v47 = vadd.f32 %v39, %v46
    %v48 = vld [vmem:[#allocation2 + $0x2] sm:$0x1]
    %49 = vset.pattern.permute.xlu0 2
    %50 = vperm.xlu0 %49, %v28
    %v51 = vpop.permute.xlu0 %50
    %v53 = vperm.slane %v48, 0
    %v54 = vmul.f32 %v51, %v53
    %v55 = vadd.f32 %v47, %v54
    %v56 = vld [vmem:[#allocation2 + $0x3] sm:$0x1]
    %57 = vset.pattern.permute.xlu0 3
    %58 = vperm.xlu0 %57, %v28
    %v59 = vpop.permute.xlu0 %58
    %v61 = vperm.slane %v56, 0
    %v62 = vmul.f32 %v59, %v61
    %v63 = vadd.f32 %v55, %v62
    %v64 = vmax.f32 %v63, 0.0
    %v65 = vld [vmem:[#allocation2 + $0x10] sm:$0xff]
    %v66 = vld [vmem:[#allocation2 + $0x18] sm:$0xff]
    %v67 = vld [vmem:[#allocation2 + $0x20] sm:$0xff]
    %v68 = vld [vmem:[#allocation2 + $0x28] sm:$0xff]
    %v69 = vld [vmem:[#allocation2 + $0x30] sm:$0x1]
    %v70 = vperm.slane %v69, 0
    %vm71 = vcmask 261120
    %v73 = vsel %vm71, %v64, 0
    %75 = vmatpush.msra.mxu0 0.0
    %76 = vmatpush.msra.mxu0 0.0
    %77 = vmatpush.msra.mxu0 0.0
    %78 = vmatpush.msra.mxu0 0.0
    %79 = vmatpush.msra.mxu0 0.0
    %80 = vmatpush.msra.mxu0 0.0
    %81 = vmatpush.msra.mxu0 0.0
    %82 = vmatpush.msra.mxu0 0.0
    %83 = vmatpush.msra.mxu0 0.0
    %84 = vmatpush.msra.mxu0 0.0
    %85 = vmatpush.msra.mxu0 0.0
    %86 = vmatpush.msra.mxu0 0.0
    %87 = vmatpush.msra.mxu0 %v68
    %88 = vmatpush.msra.mxu0 %v67
    %89 = vmatpush.msra.mxu0 %v66
    %90 = vmatpush.msra.mxu0 %v65
    %91 = vmatmul.f32.gmra.mxu0 %v73
    %v92 = vpop.f32.mrf.mxu0
    %v93 = vadd.f32 %v70, %v92
    %94 = vdwg.mxu0
    %v95 = vmax.f32 %v93, 0.0
    %v96 = vld [vmem:[#allocation2 + $0x38] sm:$0xff]
    %v97 = vld [vmem:[#allocation2 + $0x40] sm:$0xff]
    %v98 = vld [vmem:[#allocation2 + $0x48] sm:$0xff]
    %v99 = vld [vmem:[#allocation2 + $0x50] sm:$0xff]
    %v100 = vld [vmem:[#allocation2 + $0x58] sm:$0x1]
    %v101 = vperm.slane %v100, 0
    %v103 = vsel %vm71, %v95, 0
    %105 = vmatpush.msra.mxu0 0.0
    %106 = vmatpush.msra.mxu0 0.0
    %107 = vmatpush.msra.mxu0 0.0
    %108 = vmatpush.msra.mxu0 0.0
    %109 = vmatpush.msra.mxu0 0.0
    %110 = vmatpush.msra.mxu0 0.0
    %111 = vmatpush.msra.mxu0 0.0
    %112 = vmatpush.msra.mxu0 0.0
    %113 = vmatpush.msra.mxu0 0.0
    %114 = vmatpush.msra.mxu0 0.0
    %115 = vmatpush.msra.mxu0 0.0
    %116 = vmatpush.msra.mxu0 0.0
    %117 = vmatpush.msra.mxu0 %v99
    %118 = vmatpush.msra.mxu0 %v98
    %119 = vmatpush.msra.mxu0 %v97
    %120 = vmatpush.msra.mxu0 %v96
    %121 = vmatmul.f32.gmra.mxu0 %v103
    %v122 = vpop.f32.mrf.mxu0
    %v123 = vadd.f32 %v101, %v122
    %124 = vdwg.mxu0
    %125 = vst [vmem:[#allocation5] sm:$0xff] %v123
    // Predicated region
    $region14: #{tpu_custom_call.1} parent=1 // pred_check
      _
    $region15: #{tpu_custom_call.1} parent=1 // pred_check_branch
      %127 = sbr.rel (0) target = $region17
    $region16: #{tpu_custom_call.1} parent=1 // pred_region
      %129 = vsyncadd [#allocation4], 0
      %s131 = sshll.u32 [#allocation5], 4
      %s132 = int_to_ptr.vmem [resolvable:$true] %s131
      %s133 = sshll.u32 %s2, 4
      %s134 = int_to_ptr.hbm [resolvable:$true] %s133
      %136 = dma.vmem_to_hbm [thread:$0]  %s132, 128, %s134, [#allocation4]
    $region17: #{tpu_custom_call.1} parent=1 // pred_fallthru
      _
    // Predicated region
    $region18: #{tpu_custom_call.1} parent=1 // pred_check
      _
    $region19: #{tpu_custom_call.1} parent=1 // pred_check_branch
      %138 = sbr.rel (0) target = $region21
    $region20: #{tpu_custom_call.1} parent=1 // pred_region
      %140 = dma.done [#allocation4], 128
    $region21: #{tpu_custom_call.1} parent=1 // pred_fallthru
      _
    %141 = vsyncpa [#allocation3], 1
    %142 = vsyncpa [#allocation4], 1

</llo_original>
